<compile_context>
chip_gen: v7x
topology: tpu7x:2x2x1
jax: 0.10.0
libtpu: 0.0.40
codegen_flags: <defaults>
</compile_context>

<pallas_src>
import math

import jax
import jax.numpy as jnp
from jax import lax
from jax.experimental import pallas as pl
from jax.experimental.pallas import tpu as pltpu


def _mlp_kernel(x_ref, w1_ref, b1_ref, w2_ref, b2_ref, o_ref, acc_ref):
    """One (block_m, block_h) step: acc += gelu(x @ W1_tile + b1_tile) @ W2_tile."""
    k = pl.program_id(1)

    @pl.when(k == 0)
    def _init():
        acc_ref[...] = jnp.zeros_like(acc_ref)

    x = x_ref[...]                                              # (tm, C)
    h = jnp.dot(x, w1_ref[...], preferred_element_type=jnp.float32)
    h = h + b1_ref[...]                                         # (tm, th) + (1, th)

    # Exact GELU (matches torch.nn.GELU() default, approximate='none').
    inv_sqrt2 = jnp.float32(1.0 / math.sqrt(2.0))
    h = 0.5 * h * (1.0 + lax.erf(h * inv_sqrt2))

    # Accumulate the partial second matmul into the f32 scratch accumulator.
    acc_ref[...] += jnp.dot(h.astype(w2_ref.dtype), w2_ref[...],
                            preferred_element_type=jnp.float32)

    @pl.when(k == pl.num_programs(1) - 1)
    def _finalize():
        o_ref[...] = (acc_ref[...] + b2_ref[...]).astype(o_ref.dtype)


def mlp_pallas(x, w1, b1, w2, b2, *, block_m=None, block_h=None,
               compute_dtype=None, vmem_limit_bytes=48 * 1024 * 1024):
    """x: (B, T, C); w1: (C, H); b1: (H,); w2: (H, C); b2: (C,), H = 4*C.

    compute_dtype: optionally cast x / w1 / w2 (e.g. to jnp.bfloat16) so the
    matmuls run on the MXU in that dtype; accumulation stays f32 and the output
    keeps the original input dtype.
    """
    B, T, C = x.shape
    H = w1.shape[1]
    M = B * T
    out_dtype = x.dtype

    if compute_dtype is not None:
        x = x.astype(compute_dtype)
        w1 = w1.astype(compute_dtype)
        w2 = w2.astype(compute_dtype)
    # Biases stay f32 (added into the f32 accumulator path).
    b1 = b1.astype(jnp.float32)
    b2 = b2.astype(jnp.float32)

    x2 = x.reshape(M, C)
    b1_2 = b1.reshape(1, H)
    b2_2 = b2.reshape(1, C)

    # ---- tile selection -----------------------------------------------------
    if block_m is None:
        block_m = M
        for cand in (512, 256, 128):
            if M % cand == 0:
                block_m = cand
                break
    if block_h is None:
        block_h = H
        for cand in (1024, 512, 256, 128):
            if H % cand == 0:
                block_h = cand
                break
    assert M % block_m == 0, "M = B*T must be divisible by block_m"
    assert H % block_h == 0, "H must be divisible by block_h"

    x_item = jnp.dtype(x2.dtype).itemsize
    o_item = jnp.dtype(out_dtype).itemsize

    def _footprint(bm, bh):
        # Double-buffered pipelined operands + f32 accumulator scratch.
        return (2 * bm * C * x_item      # x tile
                + 2 * C * bh * x_item    # W1 tile
                + 2 * bh * 4             # b1 tile (f32)
                + 2 * bh * C * x_item    # W2 tile
                + 2 * C * 4              # b2 (f32)
                + 2 * bm * C * o_item    # output tile
                + bm * C * 4)            # accumulator

    budget = int(0.8 * vmem_limit_bytes)
    while _footprint(block_m, block_h) > budget and block_h % 256 == 0:
        block_h //= 2
    while _footprint(block_m, block_h) > budget and block_m % 256 == 0:
        block_m //= 2

    grid = (M // block_m, H // block_h)

    cost = pl.CostEstimate(
        flops=4 * M * C * H,            # two matmuls: 2*M*C*H each
        transcendentals=M * H,          # erf over the hidden activations
        bytes_accessed=(x2.size * x_item
                        + w1.size * x_item + w2.size * x_item
                        + b1_2.size * 4 + b2_2.size * 4
                        + M * C * o_item),
    )

    out2 = pl.pallas_call(
        _mlp_kernel,
        out_shape=jax.ShapeDtypeStruct((M, C), out_dtype),
        grid_spec=pltpu.PrefetchScalarGridSpec(
            num_scalar_prefetch=0,
            grid=grid,
            in_specs=[
                pl.BlockSpec((block_m, C), lambda i, k: (i, 0)),   # x rows (reused across k)
                pl.BlockSpec((C, block_h), lambda i, k: (0, k)),   # W1 H-tile
                pl.BlockSpec((1, block_h), lambda i, k: (0, k)),   # b1 H-tile
                pl.BlockSpec((block_h, C), lambda i, k: (k, 0)),   # W2 H-tile
                pl.BlockSpec((1, C), lambda i, k: (0, 0)),         # b2
            ],
            out_specs=pl.BlockSpec((block_m, C), lambda i, k: (i, 0)),
            scratch_shapes=[pltpu.VMEM((block_m, C), jnp.float32)],
        ),
        compiler_params=pltpu.CompilerParams(
            dimension_semantics=("parallel", "arbitrary"),
            vmem_limit_bytes=vmem_limit_bytes,
        ),
        cost_estimate=cost,
    )(x2, w1, b1_2, w2, b2_2)
    return out2.reshape(B, T, C)


def mlp_reference(x, w1, b1, w2, b2):
    h = jnp.dot(x, w1) + b1
    h = jax.nn.gelu(h, approximate=False)
    return jnp.dot(h, w2) + b2


if __name__ == "__main__":
    # Small GPT-style config: batch=2, seq=8, n_embd=32 (hidden=128), bias=True, dropout=0.0
    B, T, C = 2, 8, 32
    H = 4 * C

    key = jax.random.PRNGKey(0)
    kx, kw1, kb1, kw2, kb2 = jax.random.split(key, 5)

    x = jax.random.normal(kx, (B, T, C), dtype=jnp.float32)

    # Deterministic PyTorch-style Linear init (uniform +/- 1/sqrt(fan_in)),
    # weights stored as (in, out) so the kernel computes x @ W.
    bound1 = 1.0 / math.sqrt(C)
    w1 = jax.random.uniform(kw1, (C, H), minval=-bound1, maxval=bound1,
                            dtype=jnp.float32)
    b1 = jax.random.uniform(kb1, (H,), minval=-bound1, maxval=bound1,
                            dtype=jnp.float32)
    bound2 = 1.0 / math.sqrt(H)
    w2 = jax.random.uniform(kw2, (H, C), minval=-bound2, maxval=bound2,
                            dtype=jnp.float32)
    b2 = jax.random.uniform(kb2, (C,), minval=-bound2, maxval=bound2,
                            dtype=jnp.float32)

    ref = mlp_reference(x, w1, b1, w2, b2)

    # f32 path: bit-for-bit semantics of the PyTorch module (strict tolerance).
    out = mlp_pallas(x, w1, b1, w2, b2)
    out = jax.block_until_ready(out)
    assert out.shape == (B, T, C)
    assert jnp.allclose(out, ref, atol=1e-5, rtol=1e-5), "f32 mismatch vs reference"

    # bf16 compute path (MXU-friendly); f32 accumulation, looser tolerance.
    out_bf16 = mlp_pallas(x, w1, b1, w2, b2, compute_dtype=jnp.bfloat16)
    out_bf16 = jax.block_until_ready(out_bf16)
    assert out_bf16.dtype == jnp.float32
    assert jnp.allclose(out_bf16, ref, atol=5e-2, rtol=5e-2), "bf16 mismatch vs reference"

    print("KERNEL_OK")
</pallas_src>

<mosaic_0001>
module attributes {stable_mosaic.version = 11 : i64} {
  func.func @_mlp_kernel(%arg0: i32, %arg1: i32, %arg2: memref<16x32xf32, #tpu.memory_space<vmem>>, %arg3: memref<32x128xf32, #tpu.memory_space<vmem>>, %arg4: memref<1x128xf32, #tpu.memory_space<vmem>>, %arg5: memref<128x32xf32, #tpu.memory_space<vmem>>, %arg6: memref<1x32xf32, #tpu.memory_space<vmem>>, %arg7: memref<16x32xf32, #tpu.memory_space<vmem>>, %arg8: memref<16x32xf32, #tpu.memory_space<vmem>>) attributes {dimension_semantics = [#tpu.dimension_semantics<parallel>, #tpu.dimension_semantics<arbitrary>], iteration_bounds = array<i64: 1, 1>, scalar_prefetch = 0 : i64, scratch_operands = 1 : i64, tpu.core_type = #tpu.core_type<tc>, window_params = [{transform_indices = @transform_0, window_bounds = array<i64: 16, 32>}, {transform_indices = @transform_1, window_bounds = array<i64: 32, 128>}, {transform_indices = @transform_2, window_bounds = array<i64: 1, 128>}, {transform_indices = @transform_3, window_bounds = array<i64: 128, 32>}, {pipeline_mode = #tpu.pipeline_mode<synchronous>, transform_indices = @transform_4, window_bounds = array<i64: 1, 32>}, {transform_indices = @transform_5, window_bounds = array<i64: 16, 32>}]} {
    %c0_i32 = arith.constant 0 : i32
    %0 = arith.cmpi eq, %arg1, %c0_i32 : i32
    %1 = arith.extui %0 : i1 to i32
    %c0_i32_0 = arith.constant 0 : i32
    %2 = arith.cmpi ne, %1, %c0_i32_0 : i32
    scf.if %2 {
      %cst_18 = arith.constant 0.000000e+00 : f32
      %25 = vector.broadcast %cst_18 : f32 to vector<16x32xf32>
      %c0_19 = arith.constant 0 : index
      %c0_20 = arith.constant 0 : index
      %26 = vector.load %arg8[%c0_19, %c0_20] : memref<16x32xf32, #tpu.memory_space<vmem>>, vector<16x32xf32>
      tpu.vector_store %arg8[%c0_19, %c0_20], %25 {strides = array<i32>} : memref<16x32xf32, #tpu.memory_space<vmem>>, vector<16x32xf32>,
    } else {
    }
    %c0 = arith.constant 0 : index
    %c0_1 = arith.constant 0 : index
    %3 = vector.load %arg2[%c0, %c0_1] : memref<16x32xf32, #tpu.memory_space<vmem>>, vector<16x32xf32>
    %c0_2 = arith.constant 0 : index
    %c0_3 = arith.constant 0 : index
    %4 = vector.load %arg3[%c0_2, %c0_3] : memref<32x128xf32, #tpu.memory_space<vmem>>, vector<32x128xf32>
    %cst = arith.constant dense<0.000000e+00> : vector<16x128xf32>
    %5 = tpu.matmul %3, %4, %cst {dimension_numbers = #tpu.dot_dimension_numbers<[1], [0], [0], [1], [0, 0, 1, 1], [], []>} : vector<16x32xf32>, vector<32x128xf32>, vector<16x128xf32> -> vector<16x128xf32>
    %c0_4 = arith.constant 0 : index
    %c0_5 = arith.constant 0 : index
    %6 = vector.load %arg4[%c0_4, %c0_5] : memref<1x128xf32, #tpu.memory_space<vmem>>, vector<1x128xf32>
    %7 = vector.broadcast %6 : vector<1x128xf32> to vector<16x128xf32>
    %8 = arith.addf %5, %7 : vector<16x128xf32>
    %cst_6 = arith.constant 5.000000e-01 : f32
    %9 = vector.broadcast %cst_6 : f32 to vector<16x128xf32>
    %10 = arith.mulf %9, %8 : vector<16x128xf32>
    %cst_7 = arith.constant 0.707106769 : f32
    %11 = vector.broadcast %cst_7 : f32 to vector<16x128xf32>
    %12 = arith.mulf %8, %11 : vector<16x128xf32>
    %13 = math.erf %12 : vector<16x128xf32>
    %cst_8 = arith.constant 1.000000e+00 : f32
    %14 = vector.broadcast %cst_8 : f32 to vector<16x128xf32>
    %15 = arith.addf %14, %13 : vector<16x128xf32>
    %16 = arith.mulf %10, %15 : vector<16x128xf32>
    %c0_9 = arith.constant 0 : index
    %c0_10 = arith.constant 0 : index
    %17 = vector.load %arg8[%c0_9, %c0_10] : memref<16x32xf32, #tpu.memory_space<vmem>>, vector<16x32xf32>
    %c0_11 = arith.constant 0 : index
    %c0_12 = arith.constant 0 : index
    %18 = vector.load %arg5[%c0_11, %c0_12] : memref<128x32xf32, #tpu.memory_space<vmem>>, vector<128x32xf32>
    %cst_13 = arith.constant dense<0.000000e+00> : vector<16x32xf32>
    %19 = tpu.matmul %16, %18, %cst_13 {dimension_numbers = #tpu.dot_dimension_numbers<[1], [0], [0], [1], [0, 0, 1, 1], [], []>} : vector<16x128xf32>, vector<128x32xf32>, vector<16x32xf32> -> vector<16x32xf32>
    %20 = arith.addf %17, %19 : vector<16x32xf32>
    %c0_14 = arith.constant 0 : index
    %c0_15 = arith.constant 0 : index
    %21 = vector.load %arg8[%c0_14, %c0_15] : memref<16x32xf32, #tpu.memory_space<vmem>>, vector<16x32xf32>
    tpu.vector_store %arg8[%c0_14, %c0_15], %20 {strides = array<i32>} : memref<16x32xf32, #tpu.memory_space<vmem>>, vector<16x32xf32>,
    %c0_i32_16 = arith.constant 0 : i32
    %22 = arith.cmpi eq, %arg1, %c0_i32_16 : i32
    %23 = arith.extui %22 : i1 to i32
    %c0_i32_17 = arith.constant 0 : i32
    %24 = arith.cmpi ne, %23, %c0_i32_17 : i32
    scf.if %24 {
      %c0_18 = arith.constant 0 : index
      %c0_19 = arith.constant 0 : index
      %25 = vector.load %arg8[%c0_18, %c0_19] : memref<16x32xf32, #tpu.memory_space<vmem>>, vector<16x32xf32>
      %c0_20 = arith.constant 0 : index
      %c0_21 = arith.constant 0 : index
      %26 = vector.load %arg6[%c0_20, %c0_21] : memref<1x32xf32, #tpu.memory_space<vmem>>, vector<1x32xf32>
      %27 = vector.broadcast %26 : vector<1x32xf32> to vector<16x32xf32>
      %28 = arith.addf %25, %27 : vector<16x32xf32>
      %c0_22 = arith.constant 0 : index
      %c0_23 = arith.constant 0 : index
      %29 = vector.load %arg7[%c0_22, %c0_23] : memref<16x32xf32, #tpu.memory_space<vmem>>, vector<16x32xf32>
      tpu.vector_store %arg7[%c0_22, %c0_23], %28 {strides = array<i32>} : memref<16x32xf32, #tpu.memory_space<vmem>>, vector<16x32xf32>,
    } else {
    }
    return
  }
  func.func @transform_0(%arg0: i32, %arg1: i32) -> (i32, i32) {
    %c0_i32 = arith.constant 0 : i32
    %c0_i32_0 = arith.constant 0 : i32
    return %arg0, %c0_i32 : i32, i32
  }
  func.func @transform_1(%arg0: i32, %arg1: i32) -> (i32, i32) {
    %c0_i32 = arith.constant 0 : i32
    %c0_i32_0 = arith.constant 0 : i32
    return %c0_i32, %arg1 : i32, i32
  }
  func.func @transform_2(%arg0: i32, %arg1: i32) -> (i32, i32) {
    %c0_i32 = arith.constant 0 : i32
    %c0_i32_0 = arith.constant 0 : i32
    return %c0_i32, %arg1 : i32, i32
  }
  func.func @transform_3(%arg0: i32, %arg1: i32) -> (i32, i32) {
    %c0_i32 = arith.constant 0 : i32
    %c0_i32_0 = arith.constant 0 : i32
    return %arg1, %c0_i32 : i32, i32
  }
  func.func @transform_4(%arg0: i32, %arg1: i32) -> (i32, i32) {
    %c0_i32 = arith.constant 0 : i32
    %c0_i32_0 = arith.constant 0 : i32
    %c0_i32_1 = arith.constant 0 : i32
    return %c0_i32, %c0_i32_0 : i32, i32
  }
  func.func @transform_5(%arg0: i32, %arg1: i32) -> (i32, i32) {
    %c0_i32 = arith.constant 0 : i32
    %c0_i32_0 = arith.constant 0 : i32
    return %arg0, %c0_i32 : i32, i32
  }
}

</mosaic_0001>

<llo_original>
// kernel: tpu_custom_call.1
$region0: #{tpu_custom_call.1}
  #allocation0 [shape = 'u32[]', space=smem, size = 0x4, offset = 0x4, fixed_abs, tag = 'smem constant byte address 0x4 - core index']
  #allocation1 [shape = 'u32[144,128]{1,0:T(1,128)}', space=vmem, size = 0x12000, scoped, tag = 'internal scratch']
  #allocation2 [shape = 'f32[16,32]{1,0:T(8,128)}', space=vmem, size = 0x2000, scoped, tag = 'scratch operand']
  %s0 = inlined_call_operand.vmem [shape: f32[16,32], index: 0, kind: input, shape index: {}]
  %s1 = inlined_call_operand.vmem [shape: f32[32,128], index: 1, kind: input, shape index: {}]
  %s2 = inlined_call_operand.vmem [shape: f32[1,128], index: 2, kind: input, shape index: {}]
  %s3 = inlined_call_operand.vmem [shape: f32[128,32], index: 3, kind: input, shape index: {}]
  %s4 = inlined_call_operand.vmem [shape: f32[1,32], index: 4, kind: input, shape index: {}]
  %s5 = inlined_call_operand.hbm [shape: f32[16,32], index: 5, kind: output, shape index: {}]
  %s6 = sld [smem:[#allocation0]]
  $region38: #{tpu_custom_call.1} parent=0
    _
  %s8 = ssub.s32 1, %s6
  %s9 = scalar_select 0, %s8, %s6
  $region1: #{tpu_custom_call.1} parent=0
    #allocation3 [shape = 'u8[8192]{0}', space=vmem, size = 0x2000, scoped, tag = 'output window, operand 0, single buffered']
    #allocation4 [shape = 's32[1]{0}', space=sflag, size = 0x4, scoped, tag = 'scoped memory for tpu_custom_call.1']
    %10 = vsyncpa [#allocation4], 0
    // Predicated region
    $region2: #{tpu_custom_call.1} parent=1 // pred_check
      _
    $region3: #{tpu_custom_call.1} parent=1 // pred_check_branch
      %12 = sbr.rel (0) target = $region5
    $region4: #{tpu_custom_call.1} parent=1 // pred_region
      _
    $region5: #{tpu_custom_call.1} parent=1 // pred_fallthru
      _
    // Predicated region
    $region6: #{tpu_custom_call.1} parent=1 // pred_check
      _
    $region7: #{tpu_custom_call.1} parent=1 // pred_check_branch
      %14 = sbr.rel (0) target = $region9
    $region8: #{tpu_custom_call.1} parent=1 // pred_region
      _
    $region9: #{tpu_custom_call.1} parent=1 // pred_fallthru
      _
    // Predicated region
    $region10: #{tpu_custom_call.1} parent=1 // pred_check
      _
    $region11: #{tpu_custom_call.1} parent=1 // pred_check_branch
      %16 = sbr.rel (0) target = $region13
    $region12: #{tpu_custom_call.1} parent=1 // pred_region
      _
    $region13: #{tpu_custom_call.1} parent=1 // pred_fallthru
      _
    // Predicated region
    $region14: #{tpu_custom_call.1} parent=1 // pred_check
      _
    $region15: #{tpu_custom_call.1} parent=1 // pred_check_branch
      %18 = sbr.rel (0) target = $region17
    $region16: #{tpu_custom_call.1} parent=1 // pred_region
      _
    $region17: #{tpu_custom_call.1} parent=1 // pred_fallthru
      _
    // Predicated region
    $region18: #{tpu_custom_call.1} parent=1 // pred_check
      _
    $region19: #{tpu_custom_call.1} parent=1 // pred_check_branch
      %20 = sbr.rel (0) target = $region21
    $region20: #{tpu_custom_call.1} parent=1 // pred_region
      _
    $region21: #{tpu_custom_call.1} parent=1 // pred_fallthru
      _
    %p21 = scmp.eq.s32.totalorder 0, 0
    // Predicated region
    $region22: #{tpu_custom_call.1} parent=1 // pred_check
      %p22 = pneg %p21
    $region23: #{tpu_custom_call.1} parent=1 // pred_check_branch
      %24 = sbr.rel (%p22) target = $region25
    $region24: #{tpu_custom_call.1} parent=1 // pred_region
      %vm25 = vcmask 261120
      %26 = vst.msk [vmem:[#allocation2] sm:$0xff] %vm25, 0.0
      %27 = vst.msk [vmem:[#allocation2 + $0x8] sm:$0xff] %vm25, 0.0
    $region25: #{tpu_custom_call.1} parent=1 // pred_fallthru
      _
    %v28 = vld [vmem:[%s0] sm:$0xff]
    %v29 = vld [vmem:[%s0 + $0x8] sm:$0xff]
    %v30 = vld [vmem:[%s1] sm:$0xff]
    %v31 = vld [vmem:[%s1 + $0x8] sm:$0xff]
    %v32 = vld [vmem:[%s1 + $0x10] sm:$0xff]
    %v33 = vld [vmem:[%s1 + $0x18] sm:$0xff]
    %v34 = vld [vmem:[%s2] sm:$0x1]
    %v36 = vlaneseq
    %v37 = vshrl.u32 %v36, 7
    %v38 = vsub.s32 0, %v37
    %v39 = vrot.slane %v34, %v38
    %vm41 = vcmask 261120
    %v43 = vsel %vm41, %v28, 0
    %v46 = vsel %vm41, %v29, 0
    %48 = vmatprep.subr.mxu0 0.0
    %49 = vmatpush1.msra.mxu0 %v30
    %50 = vmatprep.subr.mxu0 0.0
    %51 = vmatpush1.msra.mxu0 %v31
    %52 = vmatprep.subr.mxu0 0.0
    %53 = vmatpush1.msra.mxu0 %v32
    %54 = vmatprep.subr.mxu0 0.0
    %55 = vmatpush1.msra.mxu0 %v33
    %56 = vmatprep.subr.mxu0 0.0
    %57 = vmatpush1.msra.mxu0 0.0
    %58 = vmatprep.subr.mxu0 0.0
    %59 = vmatpush1.msra.mxu0 0.0
    %60 = vmatprep.subr.mxu0 0.0
    %61 = vmatpush1.msra.mxu0 0.0
    %62 = vmatprep.subr.mxu0 0.0
    %63 = vmatpush1.msra.mxu0 0.0
    %64 = vmatprep.subr.mxu0 0.0
    %65 = vmatpush1.msra.mxu0 0.0
    %66 = vmatprep.subr.mxu0 0.0
    %67 = vmatpush1.msra.mxu0 0.0
    %68 = vmatprep.subr.mxu0 0.0
    %69 = vmatpush1.msra.mxu0 0.0
    %70 = vmatprep.subr.mxu0 0.0
    %71 = vmatpush1.msra.mxu0 0.0
    %72 = vmatprep.subr.mxu0 0.0
    %73 = vmatpush1.msra.mxu0 0.0
    %74 = vmatprep.subr.mxu0 0.0
    %75 = vmatpush1.msra.mxu0 0.0
    %76 = vmatprep.subr.mxu0 0.0
    %77 = vmatpush1.msra.mxu0 0.0
    %78 = vmatprep.subr.mxu0 0.0
    %79 = vmatpush1.msra.mxu0 0.0
    %80 = vmatprep.subr.mxu0 0.0
    %81 = vmatpush1.msra.mxu0 0.0
    %82 = vmatprep.subr.mxu0 0.0
    %83 = vmatpush1.msra.mxu0 0.0
    %84 = vmatprep.subr.mxu0 0.0
    %85 = vmatpush1.msra.mxu0 0.0
    %86 = vmatprep.subr.mxu0 0.0
    %87 = vmatpush1.msra.mxu0 0.0
    %88 = vmatprep.subr.mxu0 0.0
    %89 = vmatpush1.msra.mxu0 0.0
    %90 = vmatprep.subr.mxu0 0.0
    %91 = vmatpush1.msra.mxu0 0.0
    %92 = vmatprep.subr.mxu0 0.0
    %93 = vmatpush1.msra.mxu0 0.0
    %94 = vmatprep.subr.mxu0 0.0
    %95 = vmatpush1.msra.mxu0 0.0
    %96 = vmatprep.subr.mxu0 0.0
    %97 = vmatpush1.msra.mxu0 0.0
    %98 = vmatprep.subr.mxu0 0.0
    %99 = vmatpush1.msra.mxu0 0.0
    %100 = vmatprep.subr.mxu0 0.0
    %101 = vmatpush1.msra.mxu0 0.0
    %102 = vmatprep.subr.mxu0 0.0
    %103 = vmatpush1.msra.mxu0 0.0
    %104 = vmatprep.subr.mxu0 0.0
    %105 = vmatpush1.msra.mxu0 0.0
    %106 = vmatprep.subr.mxu0 0.0
    %107 = vmatpush1.msra.mxu0 0.0
    %108 = vmatprep.subr.mxu0 0.0
    %109 = vmatpush1.msra.mxu0 0.0
    %110 = vmatprep.subr.mxu0 0.0
    %111 = vmatpush1.msra.mxu0 0.0
    %112 = vmatprep.mubr.f32.mxu0 0.0
    %113 = vmatmul.mubr.f32.gmra.mrb[0].mxu0 %v43
    %v114 = vpop.f32.mrb[0].mxu0
    %v115 = vadd.f32 %v39, %v114
    %v116 = vpop.f32.mrb[0].mxu0
    %117 = vmatprep.mubr.f32.mxu0 0.0
    %118 = vmatmul.mubr.f32.gmra.mrb[0].mxu0 %v46
    %v119 = vpop.f32.mrb[0].mxu0
    %v120 = vadd.f32 %v39, %v119
    %v121 = vpop.f32.mrb[0].mxu0
    %122 = vdwg.mxu0
    %v123 = vmul.f32 %v115, 0.5
    %v124 = vmul.f32 %v120, 0.5
    %v125 = vmul.f32 %v115, 0.70710677
    %v126 = vmul.f32 %v120, 0.70710677
    %v127 = verf.f32.pop %v125
    %v128 = verf.f32.pop %v126
    %v129 = vadd.f32 %v127, 1.0
    %v130 = vadd.f32 %v128, 1.0
    %v131 = vmul.f32 %v123, %v129
    %v132 = vmul.f32 %v124, %v130
    %v133 = vld [vmem:[#allocation2] sm:$0xff]
    %v134 = vld [vmem:[#allocation2 + $0x8] sm:$0xff]
    %v135 = vld [vmem:[%s3] sm:$0xff]
    %v136 = vld [vmem:[%s3 + $0x8] sm:$0xff]
    %v137 = vld [vmem:[%s3 + $0x10] sm:$0xff]
    %v138 = vld [vmem:[%s3 + $0x18] sm:$0xff]
    %v139 = vld [vmem:[%s3 + $0x20] sm:$0xff]
    %v140 = vld [vmem:[%s3 + $0x28] sm:$0xff]
    %v141 = vld [vmem:[%s3 + $0x30] sm:$0xff]
    %v142 = vld [vmem:[%s3 + $0x38] sm:$0xff]
    %v143 = vld [vmem:[%s3 + $0x40] sm:$0xff]
    %v144 = vld [vmem:[%s3 + $0x48] sm:$0xff]
    %v145 = vld [vmem:[%s3 + $0x50] sm:$0xff]
    %v146 = vld [vmem:[%s3 + $0x58] sm:$0xff]
    %v147 = vld [vmem:[%s3 + $0x60] sm:$0xff]
    %v148 = vld [vmem:[%s3 + $0x68] sm:$0xff]
    %v149 = vld [vmem:[%s3 + $0x70] sm:$0xff]
    %v150 = vld [vmem:[%s3 + $0x78] sm:$0xff]
    %151 = vmatprep.subr.mxu0 0.0
    %152 = vmatpush1.msra.mxu0 %v135
    %153 = vmatprep.subr.mxu0 0.0
    %154 = vmatpush1.msra.mxu0 %v136
    %155 = vmatprep.subr.mxu0 0.0
    %156 = vmatpush1.msra.mxu0 %v137
    %157 = vmatprep.subr.mxu0 0.0
    %158 = vmatpush1.msra.mxu0 %v138
    %159 = vmatprep.subr.mxu0 0.0
    %160 = vmatpush1.msra.mxu0 %v139
    %161 = vmatprep.subr.mxu0 0.0
    %162 = vmatpush1.msra.mxu0 %v140
    %163 = vmatprep.subr.mxu0 0.0
    %164 = vmatpush1.msra.mxu0 %v141
    %165 = vmatprep.subr.mxu0 0.0
    %166 = vmatpush1.msra.mxu0 %v142
    %167 = vmatprep.subr.mxu0 0.0
    %168 = vmatpush1.msra.mxu0 %v143
    %169 = vmatprep.subr.mxu0 0.0
    %170 = vmatpush1.msra.mxu0 %v144
    %171 = vmatprep.subr.mxu0 0.0
    %172 = vmatpush1.msra.mxu0 %v145
    %173 = vmatprep.subr.mxu0 0.0
    %174 = vmatpush1.msra.mxu0 %v146
    %175 = vmatprep.subr.mxu0 0.0
    %176 = vmatpush1.msra.mxu0 %v147
    %177 = vmatprep.subr.mxu0 0.0
    %178 = vmatpush1.msra.mxu0 %v148
    %179 = vmatprep.subr.mxu0 0.0
    %180 = vmatpush1.msra.mxu0 %v149
    %181 = vmatprep.subr.mxu0 0.0
    %182 = vmatpush1.msra.mxu0 %v150
    %183 = vmatprep.subr.mxu0 0.0
    %184 = vmatpush1.msra.mxu0 0.0
    %185 = vmatprep.subr.mxu0 0.0
    %186 = vmatpush1.msra.mxu0 0.0
    %187 = vmatprep.subr.mxu0 0.0
    %188 = vmatpush1.msra.mxu0 0.0
    %189 = vmatprep.subr.mxu0 0.0
    %190 = vmatpush1.msra.mxu0 0.0
    %191 = vmatprep.subr.mxu0 0.0
    %192 = vmatpush1.msra.mxu0 0.0
    %193 = vmatprep.subr.mxu0 0.0
    %194 = vmatpush1.msra.mxu0 0.0
    %195 = vmatprep.subr.mxu0 0.0
    %196 = vmatpush1.msra.mxu0 0.0
    %197 = vmatprep.subr.mxu0 0.0
    %198 = vmatpush1.msra.mxu0 0.0
    %199 = vmatprep.subr.mxu0 0.0
    %200 = vmatpush1.msra.mxu0 0.0
    %201 = vmatprep.subr.mxu0 0.0
    %202 = vmatpush1.msra.mxu0 0.0
    %203 = vmatprep.subr.mxu0 0.0
    %204 = vmatpush1.msra.mxu0 0.0
    %205 = vmatprep.subr.mxu0 0.0
    %206 = vmatpush1.msra.mxu0 0.0
    %207 = vmatprep.subr.mxu0 0.0
    %208 = vmatpush1.msra.mxu0 0.0
    %209 = vmatprep.subr.mxu0 0.0
    %210 = vmatpush1.msra.mxu0 0.0
    %211 = vmatprep.subr.mxu0 0.0
    %212 = vmatpush1.msra.mxu0 0.0
    %213 = vmatprep.subr.mxu0 0.0
    %214 = vmatpush1.msra.mxu0 0.0
    %215 = vmatprep.mubr.f32.mxu0 0.0
    %216 = vmatmul.mubr.f32.gmra.mrb[0].mxu0 %v131
    %v217 = vpop.f32.mrb[0].mxu0
    %v218 = vadd.f32 0.0, %v217
    %v219 = vpop.f32.mrb[0].mxu0
    %220 = vmatprep.mubr.f32.mxu0 0.0
    %221 = vmatmul.mubr.f32.gmra.mrb[0].mxu0 %v132
    %v222 = vpop.f32.mrb[0].mxu0
    %v223 = vadd.f32 0.0, %v222
    %v224 = vpop.f32.mrb[0].mxu0
    %225 = vdwg.mxu0
    %v226 = vadd.f32 %v133, %v218
    %v227 = vadd.f32 %v134, %v223
    %228 = vst.msk [vmem:[#allocation2] sm:$0xff] %vm41, %v226
    %229 = vst.msk [vmem:[#allocation2 + $0x8] sm:$0xff] %vm41, %v227
    // Predicated region
    $region26: #{tpu_custom_call.1} parent=1 // pred_check
      %p230 = pneg %p21
    $region27: #{tpu_custom_call.1} parent=1 // pred_check_branch
      %232 = sbr.rel (%p230) target = $region29
    $region28: #{tpu_custom_call.1} parent=1 // pred_region
      %v233 = vld [vmem:[#allocation2] sm:$0xff]
      %v234 = vld [vmem:[#allocation2 + $0x8] sm:$0xff]
      %v235 = vld [vmem:[%s4] sm:$0x1]
      %v237 = vlaneseq
      %v238 = vshrl.u32 %v237, 7
      %v239 = vsub.s32 0, %v238
      %v240 = vrot.slane %v235, %v239
      %v242 = vadd.f32 %v233, %v240
      %v243 = vadd.f32 %v234, %v240
      %244 = vst.msk [vmem:[#allocation3] sm:$0xff] %vm41, %v242
      %245 = vst.msk [vmem:[#allocation3 + $0x8] sm:$0xff] %vm41, %v243
    $region29: #{tpu_custom_call.1} parent=1 // pred_fallthru
      _
    // Predicated region
    $region30: #{tpu_custom_call.1} parent=1 // pred_check
      _
    $region31: #{tpu_custom_call.1} parent=1 // pred_check_branch
      %247 = sbr.rel (0) target = $region33
    $region32: #{tpu_custom_call.1} parent=1 // pred_region
      %s249 = ssub.s32 256, 256
      %250 = vsyncadd [#allocation4], %s249
      %s251 = sshll.u32 [#allocation3], 4
      %s252 = int_to_ptr.vmem [resolvable:$true] %s251
      %257 = dma.vmem_to_hbm [thread:$0]  %s252, 256, %s5, [#allocation4], 128, 128, 8
    $region33: #{tpu_custom_call.1} parent=1 // pred_fallthru
      _
    // Predicated region
    $region34: #{tpu_custom_call.1} parent=1 // pred_check
      _
    $region35: #{tpu_custom_call.1} parent=1 // pred_check_branch
      %259 = sbr.rel (0) target = $region37
    $region36: #{tpu_custom_call.1} parent=1 // pred_region
      %260 = dma.done [#allocation4], 256
    $region37: #{tpu_custom_call.1} parent=1 // pred_fallthru
      _
    %261 = vsyncpa [#allocation4], 1

</llo_original>
